<compile_context>
chip_gen: v5e
topology: v5e:2x2
jax: 0.10.0
libtpu: 0.0.40
codegen_flags: <defaults>
</compile_context>

<pallas_src>
import functools

import jax
import jax.numpy as jnp
from jax import lax
from jax.experimental import pallas as pl
from jax.experimental.pallas import tpu as pltpu

LANES = 128
MAX_TILE_ROWS = 1024                 # 1024 * 128 * 4 B = 512 KiB per input tile
VMEM_LIMIT_BYTES = 32 * 1024 * 1024  # explicit, portable across v5e/v6e/v7x


def _ssd_kernel(p_ref, t_ref, o_ref, *, rows, tile_rows, part_tiles, needs_mask):
    """Accumulate per-(sublane, lane) partial sums of (p - t)^2 for this tile."""
    @pl.when(pl.program_id(1) == 0)
    def _():
        o_ref[...] = jnp.zeros_like(o_ref)

    d = p_ref[...].astype(jnp.float32) - t_ref[...].astype(jnp.float32)
    d2 = d * d
    if needs_mask:
        # The last row-tile may extend past `rows`; the padded region holds
        # unspecified values, so select them to exactly zero.
        tile_idx = pl.program_id(0) * part_tiles + pl.program_id(1)
        row0 = tile_idx * tile_rows
        ridx = row0 + lax.broadcasted_iota(jnp.int32, (tile_rows, LANES), 0)
        d2 = jnp.where(ridx < rows, d2, 0.0)

    # Sublane-only reduction (VPU adds across vregs); lane dimension is kept,
    # so no cross-lane XLU reduce in the hot loop.
    o_ref[...] += jnp.sum(d2.reshape(tile_rows // 8, 8, LANES), axis=0)


def sum_sq_diff(p, t):
    """Returns scalar sum((p - t)^2) in float32 (Pallas kernel on TPU)."""
    assert p.shape == t.shape, (p.shape, t.shape)
    n = p.size

    # Fallback for shapes the tiled kernel cannot cover without a copy.
    # TODO(synk): add a masked 1-D kernel path for n % 128 != 0 if such
    # feature-map sizes ever show up; for now plain jnp is exact and cheap.
    if n % LANES != 0 or n < 8 * LANES:
        d = (p.astype(jnp.float32) - t.astype(jnp.float32)).reshape(-1)
        return jnp.sum(d * d)

    rows = n // LANES
    tile_rows = min(MAX_TILE_ROWS, (rows // 8) * 8)   # sublane-aligned, <=512 KiB
    total_tiles = pl.cdiv(rows, tile_rows)
    needs_mask = (rows % tile_rows) != 0

    # Split the reduction across TensorCores when it divides evenly (v7x has
    # 2 TCs; on single-TC chips the "parallel" axis is harmless).
    num_parallel = 2 if (total_tiles >= 2 and total_tiles % 2 == 0) else 1
    part_tiles = total_tiles // num_parallel

    pf = p.reshape(rows, LANES)   # free reshape, no pad copy
    tf = t.reshape(rows, LANES)

    kernel = functools.partial(
        _ssd_kernel,
        rows=rows,
        tile_rows=tile_rows,
        part_tiles=part_tiles,
        needs_mask=needs_mask,
    )

    in_spec = pl.BlockSpec((tile_rows, LANES), lambda c, i: (c * part_tiles + i, 0))
    out = pl.pallas_call(
        kernel,
        out_shape=jax.ShapeDtypeStruct((num_parallel * 8, LANES), jnp.float32),
        grid_spec=pltpu.PrefetchScalarGridSpec(
            num_scalar_prefetch=0,
            grid=(num_parallel, part_tiles),
            in_specs=[in_spec, in_spec],
            out_specs=pl.BlockSpec((8, LANES), lambda c, i: (c, 0)),
        ),
        compiler_params=pltpu.CompilerParams(
            dimension_semantics=("parallel", "arbitrary"),
            vmem_limit_bytes=VMEM_LIMIT_BYTES,
        ),
    )(pf, tf)
    # Single cheap cross-lane reduction of the (num_parallel*8, 128) partials.
    return jnp.sum(out)


def content_loss_l2(preds, targets, weights=None):
    """JAX/Pallas equivalent of ContentLoss_L2.forward."""
    if weights is None:
        weights = [1.0] * len(targets)
    # TODO(synk): for long lists of tiny feature maps, fuse all layers into a
    # single pallas_call with scalar-prefetched offsets to amortize launches.
    loss = jnp.float32(0.0)
    for p, t, w in zip(preds, targets, weights):
        mse = sum_sq_diff(p, t) / jnp.float32(p.size)   # F.mse_loss (mean)
        loss = loss + mse * jnp.float32(w)
    return loss * jnp.float32(0.5)


if __name__ == "__main__":
    key = jax.random.PRNGKey(0)
    k1, k2, k3, k4 = jax.random.split(key, 4)

    # Two "feature layers" (NCHW shapes, as a VGG-style extractor would give).
    t_shapes = [(2, 4, 16, 16), (2, 8, 8, 8)]
    weights = [1.0, 0.5]

    targets = [
        jax.random.normal(k1, t_shapes[0], dtype=jnp.float32),
        jax.random.normal(k2, t_shapes[1], dtype=jnp.float32),
    ]
    preds = [
        jax.random.normal(k3, t_shapes[0], dtype=jnp.float32),
        jax.random.normal(k4, t_shapes[1], dtype=jnp.float32),
    ]

    loss = content_loss_l2(preds, targets, weights)
    loss = jax.block_until_ready(loss)

    # Pure-JAX reference check.
    ref = jnp.float32(0.0)
    for p, t, w in zip(preds, targets, weights):
        ref = ref + jnp.mean((p - t) ** 2) * w
    ref = ref * 0.5

    assert jnp.allclose(loss, ref, rtol=1e-5, atol=1e-6), (loss, ref)
    print("KERNEL_OK")
</pallas_src>

<mosaic_0001>
module attributes {stable_mosaic.version = 11 : i64} {
  func.func @_ssd_kernel(%arg0: i32, %arg1: i32, %arg2: memref<16x128xf32, #tpu.memory_space<vmem>>, %arg3: memref<16x128xf32, #tpu.memory_space<vmem>>, %arg4: memref<8x128xf32, #tpu.memory_space<vmem>>) attributes {dimension_semantics = [#tpu.dimension_semantics<parallel>, #tpu.dimension_semantics<arbitrary>], iteration_bounds = array<i64: 1, 1>, scalar_prefetch = 0 : i64, scratch_operands = 0 : i64, tpu.core_type = #tpu.core_type<tc>, window_params = [{transform_indices = @transform_0, window_bounds = array<i64: 16, 128>}, {transform_indices = @transform_1, window_bounds = array<i64: 16, 128>}, {transform_indices = @transform_2, window_bounds = array<i64: 8, 128>}]} {
    %c0_i32 = arith.constant 0 : i32
    %0 = arith.cmpi eq, %arg1, %c0_i32 : i32
    %1 = arith.extui %0 : i1 to i32
    %c0_i32_0 = arith.constant 0 : i32
    %2 = arith.cmpi ne, %1, %c0_i32_0 : i32
    scf.if %2 {
      %cst_8 = arith.constant 0.000000e+00 : f32
      %12 = vector.broadcast %cst_8 : f32 to vector<8x128xf32>
      %c0_9 = arith.constant 0 : index
      %c0_10 = arith.constant 0 : index
      %13 = vector.load %arg4[%c0_9, %c0_10] : memref<8x128xf32, #tpu.memory_space<vmem>>, vector<8x128xf32>
      tpu.vector_store %arg4[%c0_9, %c0_10], %12 {strides = array<i32>} : memref<8x128xf32, #tpu.memory_space<vmem>>, vector<8x128xf32>,
    } else {
    }
    %c0 = arith.constant 0 : index
    %c0_1 = arith.constant 0 : index
    %3 = vector.load %arg2[%c0, %c0_1] : memref<16x128xf32, #tpu.memory_space<vmem>>, vector<16x128xf32>
    %c0_2 = arith.constant 0 : index
    %c0_3 = arith.constant 0 : index
    %4 = vector.load %arg3[%c0_2, %c0_3] : memref<16x128xf32, #tpu.memory_space<vmem>>, vector<16x128xf32>
    %5 = arith.subf %3, %4 : vector<16x128xf32>
    %6 = arith.mulf %5, %5 : vector<16x128xf32>
    %c0_4 = arith.constant 0 : index
    %c0_5 = arith.constant 0 : index
    %7 = vector.load %arg4[%c0_4, %c0_5] : memref<8x128xf32, #tpu.memory_space<vmem>>, vector<8x128xf32>
    %8 = vector.shape_cast %6 : vector<16x128xf32> to vector<2x8x128xf32>
    %cst = arith.constant dense<0.000000e+00> : vector<8x128xf32>
    %9 = vector.multi_reduction <add>, %8, %cst [0] : vector<2x8x128xf32> to vector<8x128xf32>
    %10 = arith.addf %7, %9 : vector<8x128xf32>
    %c0_6 = arith.constant 0 : index
    %c0_7 = arith.constant 0 : index
    %11 = vector.load %arg4[%c0_6, %c0_7] : memref<8x128xf32, #tpu.memory_space<vmem>>, vector<8x128xf32>
    tpu.vector_store %arg4[%c0_6, %c0_7], %10 {strides = array<i32>} : memref<8x128xf32, #tpu.memory_space<vmem>>, vector<8x128xf32>,
    return
  }
  func.func @transform_0(%arg0: i32, %arg1: i32) -> (i32, i32) {
    %c1_i32 = arith.constant 1 : i32
    %0 = arith.muli %arg0, %c1_i32 : i32
    %1 = arith.addi %0, %arg1 : i32
    %c0_i32 = arith.constant 0 : i32
    %c0_i32_0 = arith.constant 0 : i32
    return %1, %c0_i32 : i32, i32
  }
  func.func @transform_1(%arg0: i32, %arg1: i32) -> (i32, i32) {
    %c1_i32 = arith.constant 1 : i32
    %0 = arith.muli %arg0, %c1_i32 : i32
    %1 = arith.addi %0, %arg1 : i32
    %c0_i32 = arith.constant 0 : i32
    %c0_i32_0 = arith.constant 0 : i32
    return %1, %c0_i32 : i32, i32
  }
  func.func @transform_2(%arg0: i32, %arg1: i32) -> (i32, i32) {
    %c0_i32 = arith.constant 0 : i32
    %c0_i32_0 = arith.constant 0 : i32
    return %arg0, %c0_i32 : i32, i32
  }
}

</mosaic_0001>

<llo_original>
// kernel: tpu_custom_call.1
$region0: #{tpu_custom_call.1}
  #allocation0 [shape = 'u32[]', space=smem, size = 0x4, offset = 0x4, fixed_abs, tag = 'smem constant byte address 0x4 - core index']
  #allocation1 [shape = 'u32[72,128]{1,0:T(1,128)}', space=vmem, size = 0x9000, scoped, tag = 'internal scratch']
  %s0 = inlined_call_operand.hbm [shape: f32[16,128], index: 0, kind: input, shape index: {}]
  %s1 = inlined_call_operand.hbm [shape: f32[16,128], index: 1, kind: input, shape index: {}]
  %s2 = inlined_call_operand.hbm [shape: f32[8,128], index: 2, kind: output, shape index: {}]
  %s3 = sld [smem:[#allocation0]]
  $region30: #{tpu_custom_call.1} parent=0
    _
  %s5 = ssub.s32 1, %s3
  %s6 = scalar_select 0, %s5, %s3
  $region1: #{tpu_custom_call.1} parent=0
    #allocation2 [shape = 'u8[8192]{0}', space=vmem, size = 0x2000, scoped, tag = 'input window, operand 0, single buffered']
    #allocation3 [shape = 's32[1]{0}', space=sflag, size = 0x4, scoped, tag = 'scoped memory for tpu_custom_call.1']
    #allocation4 [shape = 's32[1]{0}', space=sflag, size = 0x4, scoped, tag = 'scoped memory for tpu_custom_call.1']
    #allocation5 [shape = 'u8[8192]{0}', space=vmem, size = 0x2000, scoped, tag = 'input window, operand 1, single buffered']
    #allocation6 [shape = 's32[1]{0}', space=sflag, size = 0x4, scoped, tag = 'scoped memory for tpu_custom_call.1']
    #allocation7 [shape = 'u8[4096]{0}', space=vmem, size = 0x1000, scoped, tag = 'output window, operand 0, single buffered']
    %7 = vsyncpa [#allocation3], 0
    %8 = vsyncpa [#allocation6], 0
    %9 = vsyncpa [#allocation4], 0
    // Predicated region
    $region2: #{tpu_custom_call.1} parent=1 // pred_check
      _
    $region3: #{tpu_custom_call.1} parent=1 // pred_check_branch
      %11 = sbr.rel (0) target = $region5
    $region4: #{tpu_custom_call.1} parent=1 // pred_region
      %s12 = sadd.s32 0, 0
      %s13 = smul.u32 2, %s12
      %15 = vsyncadd [#allocation3], 0
      %s16 = smul.addr %s13, 8
      %s17 = scalar_lea.hbm %s0, %s16
      %s18 = sshll.u32 %s17, 4
      %s19 = int_to_ptr.hbm [resolvable:$true] %s18
      %s20 = sshll.u32 [#allocation2], 4
      %s21 = int_to_ptr.vmem [resolvable:$true] %s20
      %26 = dma.hbm_to_vmem [thread:$0]  %s19, 256, %s21, [#allocation3], 128, 128, 8
    $region5: #{tpu_custom_call.1} parent=1 // pred_fallthru
      _
    // Predicated region
    $region6: #{tpu_custom_call.1} parent=1 // pred_check
      _
    $region7: #{tpu_custom_call.1} parent=1 // pred_check_branch
      %28 = sbr.rel (0) target = $region9
    $region8: #{tpu_custom_call.1} parent=1 // pred_region
      %s29 = sadd.s32 0, 0
      %s30 = smul.u32 2, %s29
      %32 = vsyncadd [#allocation6], 0
      %s33 = smul.addr %s30, 8
      %s34 = scalar_lea.hbm %s1, %s33
      %s35 = sshll.u32 %s34, 4
      %s36 = int_to_ptr.hbm [resolvable:$true] %s35
      %s37 = sshll.u32 [#allocation5], 4
      %s38 = int_to_ptr.vmem [resolvable:$true] %s37
      %43 = dma.hbm_to_vmem [thread:$0]  %s36, 256, %s38, [#allocation6], 128, 128, 8
    $region9: #{tpu_custom_call.1} parent=1 // pred_fallthru
      _
    // Predicated region
    $region10: #{tpu_custom_call.1} parent=1 // pred_check
      _
    $region11: #{tpu_custom_call.1} parent=1 // pred_check_branch
      %45 = sbr.rel (0) target = $region13
    $region12: #{tpu_custom_call.1} parent=1 // pred_region
      %47 = dma.done [#allocation3], 256
    $region13: #{tpu_custom_call.1} parent=1 // pred_fallthru
      _
    // Predicated region
    $region14: #{tpu_custom_call.1} parent=1 // pred_check
      _
    $region15: #{tpu_custom_call.1} parent=1 // pred_check_branch
      %49 = sbr.rel (0) target = $region17
    $region16: #{tpu_custom_call.1} parent=1 // pred_region
      %51 = dma.done [#allocation6], 256
    $region17: #{tpu_custom_call.1} parent=1 // pred_fallthru
      _
    %s52 = sadd.s32 0, 0
    %s53 = smul.u32 2, %s52
    %s54 = sadd.s32 0, 0
    %s55 = smul.u32 2, %s54
    %p56 = scmp.eq.s32.totalorder 0, 0
    // Predicated region
    $region18: #{tpu_custom_call.1} parent=1 // pred_check
      %p57 = pneg %p56
    $region19: #{tpu_custom_call.1} parent=1 // pred_check_branch
      %59 = sbr.rel (%p57) target = $region21
    $region20: #{tpu_custom_call.1} parent=1 // pred_region
      %60 = vst [vmem:[#allocation7] sm:$0xff] 0.0
    $region21: #{tpu_custom_call.1} parent=1 // pred_fallthru
      _
    %v61 = vld [vmem:[#allocation2] sm:$0xff]
    %v62 = vld [vmem:[#allocation2 + $0x8] sm:$0xff]
    %v63 = vld [vmem:[#allocation5] sm:$0xff]
    %v64 = vld [vmem:[#allocation5 + $0x8] sm:$0xff]
    %v65 = vsub.f32 %v61, %v63
    %v66 = vsub.f32 %v62, %v64
    %v67 = vmul.f32 %v65, %v65
    %v68 = vmul.f32 %v66, %v66
    %v69 = vld [vmem:[#allocation7] sm:$0xff]
    %v70 = vadd.f32 %v67, %v68
    %v71 = vadd.f32 %v69, %v70
    %72 = vst [vmem:[#allocation7] sm:$0xff] %v71
    // Predicated region
    $region22: #{tpu_custom_call.1} parent=1 // pred_check
      _
    $region23: #{tpu_custom_call.1} parent=1 // pred_check_branch
      %74 = sbr.rel (0) target = $region25
    $region24: #{tpu_custom_call.1} parent=1 // pred_region
      %76 = vsyncadd [#allocation4], 0
      %s78 = sshll.u32 [#allocation7], 4
      %s79 = int_to_ptr.vmem [resolvable:$true] %s78
      %s80 = sshll.u32 %s2, 4
      %s81 = int_to_ptr.hbm [resolvable:$true] %s80
      %83 = dma.vmem_to_hbm [thread:$0]  %s79, 128, %s81, [#allocation4]
    $region25: #{tpu_custom_call.1} parent=1 // pred_fallthru
      _
    // Predicated region
    $region26: #{tpu_custom_call.1} parent=1 // pred_check
      _
    $region27: #{tpu_custom_call.1} parent=1 // pred_check_branch
      %85 = sbr.rel (0) target = $region29
    $region28: #{tpu_custom_call.1} parent=1 // pred_region
      %87 = dma.done [#allocation4], 128
    $region29: #{tpu_custom_call.1} parent=1 // pred_fallthru
      _
    %88 = vsyncpa [#allocation3], 1
    %89 = vsyncpa [#allocation6], 1
    %90 = vsyncpa [#allocation4], 1

</llo_original>
